<compile_context>
chip_gen: v6e
topology: v6e:2x2x1
jax: 0.10.0
libtpu: 0.0.40
codegen_flags: <defaults>
</compile_context>

<pallas_src>
import math

import jax
import jax.numpy as jnp
import numpy as np
from jax.experimental import pallas as pl
from jax.experimental.pallas import tpu as pltpu

# ---- static config (arg.DELTA_T, world box, arg.TERMINAL_VEL) ----
DT = 0.1
BOX = 1.0
TERMINAL_VEL = 0.1
TWO_PI = 2.0 * math.pi

LANE = 128          # lane width (batch padded to a multiple of this)
MAX_TILE_B = 2048   # lanes per grid step (~1.6 MiB working set, fits v5e/v6e/v7x)

_PARAM_ROWS = 24    # 17 used: x(5) a(2) ox(2) pg(2) pnv(2) og(2) onv(2)
_P_ROWS = 32        # 25 used: row-major 5x5 covariance
_OUT_ROWS = 8       # 6 used: bx(5) + terminal flag(1)


def belief_step_kernel(params_ref, p_ref, out_ref, pnew_ref):
    def prm(i):                     # (1, tile_b) parameter row
        return params_ref[i:i + 1, :]

    def pin(i, j):                  # (1, tile_b) covariance entry P[i, j]
        k = 5 * i + j
        return p_ref[k:k + 1, :]

    px0, py0, ang0 = prm(0), prm(1), prm(2)
    a0, a1 = prm(5), prm(6)
    ox0, ox1 = prm(7), prm(8)
    pg0, pg1 = prm(9), prm(10)
    pnv0, pnv1 = prm(11), prm(12)
    og0, og1 = prm(13), prm(14)
    onv0, onv1 = prm(15), prm(16)

    # ---------------- dynamics (mean) ----------------
    # TODO(synk): process noise sqrt(exp(pro_noise_ln_vars)) * randn(2) omitted
    # (deterministic kernel) -- this is the mean dynamics.
    vel = pg0 * a0
    ang_vel = pg1 * a1
    ang = ang0 + ang_vel * DT
    ang = ang - TWO_PI * jnp.floor(ang / TWO_PI)          # range_angle
    ang = jnp.where(ang > math.pi, ang - TWO_PI, ang)
    cos_a = jnp.cos(ang)
    sin_a = jnp.sin(ang)
    px = jnp.clip(px0 + vel * cos_a * DT, -BOX, BOX)
    py = jnp.clip(py0 + vel * sin_a * DT, -BOX, BOX)

    # ---------------- EKF predict: P_ = A P A^T + Q ----------------
    # A = [[1,0,a02,0,0],[0,1,a12,0,0],[0,0,1,0,0],[0..],[0..]] so A P A^T is
    # nonzero only in its top-left 3x3 block; Q adds the two process-noise
    # variances on the (3,3)/(4,4) diagonal.
    a02 = -vel * sin_a * DT
    a12 = vel * cos_a * DT
    q0 = jnp.exp(pnv0)
    q1 = jnp.exp(pnv1)

    p00, p01, p02 = pin(0, 0), pin(0, 1), pin(0, 2)
    p10, p11, p12 = pin(1, 0), pin(1, 1), pin(1, 2)
    p20, p21, p22 = pin(2, 0), pin(2, 1), pin(2, 2)

    ap00 = p00 + a02 * p20
    ap01 = p01 + a02 * p21
    ap02 = p02 + a02 * p22
    ap10 = p10 + a12 * p20
    ap11 = p11 + a12 * p21
    ap12 = p12 + a12 * p22

    pp00 = ap00 + a02 * ap02
    pp01 = ap01 + a12 * ap02
    pp02 = ap02
    pp10 = ap10 + a02 * ap12
    pp11 = ap11 + a12 * ap12
    pp12 = ap12
    pp20 = p20 + a02 * p22
    pp21 = p21 + a12 * p22
    pp22 = p22
    pp33 = q0
    pp44 = q1

    # ---------------- EKF update ----------------
    # H = [[0,0,0,og0,0],[0,0,0,0,og1]], R = diag(exp(onv)). With P_ of the
    # structure above, S = H P_ H^T + R is diagonal and K has only the
    # (3,0)/(4,1) entries (exactly what the dense torch formulas produce).
    # TODO(synk): observation noise omitted -> error uses observations_mean().
    err0 = ox0 - og0 * vel
    err1 = ox1 - og1 * ang_vel
    r0 = jnp.exp(onv0)
    r1 = jnp.exp(onv1)
    s00 = og0 * og0 * pp33 + r0
    s11 = og1 * og1 * pp44 + r1
    inv_det = 1.0 / (s00 * s11)        # exact reciprocal (no approx=True here)
    sinv00 = s11 * inv_det
    sinv11 = s00 * inv_det
    k30 = og0 * pp33 * sinv00
    k41 = og1 * pp44 * sinv11

    bvel = vel + k30 * err0
    bang_vel = ang_vel + k41 * err1
    pn33 = (1.0 - k30 * og0) * pp33
    pn44 = (1.0 - k41 * og1) * pp44
    # TODO(synk): is_pos_def() debug branch (prints + conditional
    # symmetrization) skipped -- debug-only code path.

    term = (jnp.sqrt(a0 * a0 + a1 * a1) <= TERMINAL_VEL).astype(jnp.float32)

    # ---------------- packed, lane-dense stores ----------------
    out_ref[...] = jnp.zeros_like(out_ref)
    out_ref[0:1, :] = px
    out_ref[1:2, :] = py
    out_ref[2:3, :] = ang
    out_ref[3:4, :] = bvel
    out_ref[4:5, :] = bang_vel
    out_ref[5:6, :] = term

    pnew_ref[...] = jnp.zeros_like(pnew_ref)
    pnew_ref[0:1, :] = pp00
    pnew_ref[1:2, :] = pp01
    pnew_ref[2:3, :] = pp02
    pnew_ref[5:6, :] = pp10
    pnew_ref[6:7, :] = pp11
    pnew_ref[7:8, :] = pp12
    pnew_ref[10:11, :] = pp20
    pnew_ref[11:12, :] = pp21
    pnew_ref[12:13, :] = pp22
    pnew_ref[18:19, :] = pn33
    pnew_ref[24:25, :] = pn44


@jax.jit
def belief_step_batch(x, P, a, ox, pro_gains, pro_noise_ln_vars, obs_gains,
                      obs_noise_ln_vars):
    """One EKF belief step for a batch of B independent beliefs.

    x: (B,5), P: (B,5,5), a / ox / gains / ln_vars: (B,2).
    Returns bx (B,5), P_new (B,5,5), terminal (B,) bool.
    """
    f32 = jnp.float32
    B = x.shape[0]
    padded = -(-B // LANE) * LANE
    tile_b = min(padded, MAX_TILE_B)
    padded = -(-padded // tile_b) * tile_b
    grid = (padded // tile_b,)

    def lanes(v, rows):   # (B, ...) -> (rows, padded) with batch on lanes
        v = jnp.asarray(v, f32).reshape(B, rows).T
        return jnp.pad(v, ((0, 0), (0, padded - B)))

    params = jnp.concatenate(
        [lanes(x, 5), lanes(a, 2), lanes(ox, 2), lanes(pro_gains, 2),
         lanes(pro_noise_ln_vars, 2), lanes(obs_gains, 2),
         lanes(obs_noise_ln_vars, 2)], axis=0)                     # (17, padded)
    params = jnp.pad(params, ((0, _PARAM_ROWS - 17), (0, 0)))      # (24, padded)
    p_packed = jnp.pad(lanes(P, 25), ((0, _P_ROWS - 25), (0, 0)))  # (32, padded)

    out, p_new = pl.pallas_call(
        belief_step_kernel,
        out_shape=(jax.ShapeDtypeStruct((_OUT_ROWS, padded), f32),
                   jax.ShapeDtypeStruct((_P_ROWS, padded), f32)),
        grid=grid,
        in_specs=[pl.BlockSpec((_PARAM_ROWS, tile_b), lambda i: (0, i)),
                  pl.BlockSpec((_P_ROWS, tile_b), lambda i: (0, i))],
        out_specs=(pl.BlockSpec((_OUT_ROWS, tile_b), lambda i: (0, i)),
                   pl.BlockSpec((_P_ROWS, tile_b), lambda i: (0, i))),
        input_output_aliases={1: 1},        # update the covariance slab in place
        compiler_params=pltpu.CompilerParams(
            dimension_semantics=("parallel",)),
    )(params, p_packed)

    bx = out[0:5, :B].T                       # (B, 5)
    terminal = out[5, :B] > 0.5               # (B,) bool
    P_new = p_new[0:25, :B].T.reshape(B, 5, 5)
    return bx, P_new, terminal


def belief_step(x, P, a, ox, pro_gains, pro_noise_ln_vars, obs_gains,
                obs_noise_ln_vars):
    """Unbatched forward (same semantics as BeliefStep.forward)."""
    add_b = lambda v: jnp.asarray(v, jnp.float32)[None]
    bx, P_new, term = belief_step_batch(
        add_b(x), add_b(P), add_b(a), add_b(ox), add_b(pro_gains),
        add_b(pro_noise_ln_vars), add_b(obs_gains), add_b(obs_noise_ln_vars))
    return bx[0], P_new[0], bool(term[0])


def belief_step_ref(x, P, a, ox, pg, pnv, og, onv):
    """Pure-numpy reference with the dense torch-style formulas."""
    x, P, a, ox = map(lambda v: np.asarray(v, np.float32), (x, P, a, ox))
    pg, pnv, og, onv = map(lambda v: np.asarray(v, np.float32),
                           (pg, pnv, og, onv))
    vel = pg[0] * a[0]
    ang_vel = pg[1] * a[1]
    ang = x[2] + ang_vel * DT
    ang = ang - TWO_PI * np.floor(ang / TWO_PI)
    if ang > np.pi:
        ang = ang - TWO_PI
    px = np.clip(x[0] + vel * np.cos(ang) * DT, -BOX, BOX)
    py = np.clip(x[1] + vel * np.sin(ang) * DT, -BOX, BOX)
    x_new = np.array([px, py, ang, vel, ang_vel], np.float32)

    A = np.zeros((5, 5), np.float32)
    A[:3, :3] = np.eye(3)
    A[0, 2] = -vel * np.sin(ang) * DT
    A[1, 2] = vel * np.cos(ang) * DT
    Q = np.zeros((5, 5), np.float32)
    Q[3, 3] = np.exp(pnv[0])
    Q[4, 4] = np.exp(pnv[1])
    P_pred = A @ P @ A.T + Q

    H = np.zeros((2, 5), np.float32)
    H[0, 3] = og[0]
    H[1, 4] = og[1]
    R = np.diag(np.exp(onv)).astype(np.float32)
    err = ox - og * x_new[3:5]
    S = H @ P_pred @ H.T + R
    K = P_pred @ H.T @ np.linalg.inv(S)
    bx = x_new + K @ err
    P_new = (np.eye(5, dtype=np.float32) - K @ H) @ P_pred
    term = bool(np.linalg.norm(a) <= TERMINAL_VEL)
    return bx, P_new, term


if __name__ == "__main__":
    key = jax.random.PRNGKey(0)
    ks = jax.random.split(key, 12)
    B = 6  # small demo batch (padded to 128 lanes internally)

    # belief means
    x0 = jnp.concatenate([
        jax.random.uniform(ks[0], (B, 2), minval=-0.5, maxval=0.5),     # px, py
        jax.random.uniform(ks[1], (B, 1), minval=-math.pi, maxval=math.pi),
        jax.random.uniform(ks[2], (B, 2), minval=-0.3, maxval=0.3),     # vel, ang_vel
    ], axis=1).astype(jnp.float32)

    # covariances: general SPD matrices (exercise the full predict path) plus
    # the module's reset() value P = 1e-8 * I in lane 0.
    M = jax.random.normal(ks[3], (B, 5, 5), jnp.float32) * 0.1
    eye5 = jnp.eye(5, dtype=jnp.float32)
    P0 = jnp.einsum("bij,bkj->bik", M, M) + 1e-8 * eye5
    P0 = P0.at[0].set(1e-8 * eye5)

    a = jax.random.uniform(ks[4], (B, 2), minval=-1.0, maxval=1.0).astype(jnp.float32)
    a = a.at[1].set(jnp.array([0.03, -0.02], jnp.float32))   # terminal action
    ox = jax.random.uniform(ks[5], (B, 2), minval=-0.3, maxval=0.3).astype(jnp.float32)

    pro_gains = jnp.stack([
        jax.random.uniform(ks[6], (B,), minval=0.8, maxval=1.2),
        jax.random.uniform(ks[7], (B,), minval=0.8, maxval=1.2) * (math.pi / 2),
    ], axis=1).astype(jnp.float32)
    pro_noise_ln_vars = jax.random.uniform(ks[8], (B, 2), minval=-4.0,
                                           maxval=-2.0).astype(jnp.float32)
    obs_gains = jax.random.uniform(ks[9], (B, 2), minval=0.8,
                                   maxval=1.2).astype(jnp.float32)
    obs_noise_ln_vars = jax.random.uniform(ks[10], (B, 2), minval=-4.5,
                                           maxval=-2.5).astype(jnp.float32)

    bx, P_new, term = belief_step_batch(x0, P0, a, ox, pro_gains,
                                        pro_noise_ln_vars, obs_gains,
                                        obs_noise_ln_vars)
    jax.block_until_ready((bx, P_new, term))

    bx_np = np.asarray(bx)
    P_np = np.asarray(P_new)
    term_np = np.asarray(term)
    for b in range(B):
        bx_r, P_r, t_r = belief_step_ref(
            np.asarray(x0[b]), np.asarray(P0[b]), np.asarray(a[b]),
            np.asarray(ox[b]), np.asarray(pro_gains[b]),
            np.asarray(pro_noise_ln_vars[b]), np.asarray(obs_gains[b]),
            np.asarray(obs_noise_ln_vars[b]))
        assert np.allclose(bx_np[b], bx_r, rtol=2e-3, atol=1e-5), \
            f"bx mismatch at batch {b}"
        assert np.allclose(P_np[b], P_r, rtol=2e-3, atol=1e-6), \
            f"P mismatch at batch {b}"
        assert bool(term_np[b]) == t_r, f"terminal flag mismatch at batch {b}"

    print("KERNEL_OK")
</pallas_src>

<mosaic_0001>
module attributes {stable_mosaic.version = 11 : i64} {
  func.func @belief_step_kernel(%arg0: i32, %arg1: memref<24x128xf32, #tpu.memory_space<vmem>>, %arg2: memref<32x128xf32, #tpu.memory_space<vmem>>, %arg3: memref<8x128xf32, #tpu.memory_space<vmem>>, %arg4: memref<32x128xf32, #tpu.memory_space<vmem>>) attributes {dimension_semantics = [#tpu.dimension_semantics<parallel>], iteration_bounds = array<i64: 1>, scalar_prefetch = 0 : i64, scratch_operands = 0 : i64, tpu.core_type = #tpu.core_type<tc>, window_params = [{transform_indices = @transform_0, window_bounds = array<i64: 24, 128>}, {transform_indices = @transform_1, window_bounds = array<i64: 32, 128>}, {transform_indices = @transform_2, window_bounds = array<i64: 8, 128>}, {transform_indices = @transform_3, window_bounds = array<i64: 32, 128>}]} {
    %c0 = arith.constant 0 : index
    %c0_0 = arith.constant 0 : index
    %0 = vector.load %arg1[%c0, %c0_0] : memref<24x128xf32, #tpu.memory_space<vmem>>, vector<1x128xf32>
    %c1 = arith.constant 1 : index
    %c0_1 = arith.constant 0 : index
    %1 = vector.load %arg1[%c1, %c0_1] : memref<24x128xf32, #tpu.memory_space<vmem>>, vector<1x128xf32>
    %c2 = arith.constant 2 : index
    %c0_2 = arith.constant 0 : index
    %2 = vector.load %arg1[%c2, %c0_2] : memref<24x128xf32, #tpu.memory_space<vmem>>, vector<1x128xf32>
    %c5 = arith.constant 5 : index
    %c0_3 = arith.constant 0 : index
    %3 = vector.load %arg1[%c5, %c0_3] : memref<24x128xf32, #tpu.memory_space<vmem>>, vector<1x128xf32>
    %c6 = arith.constant 6 : index
    %c0_4 = arith.constant 0 : index
    %4 = vector.load %arg1[%c6, %c0_4] : memref<24x128xf32, #tpu.memory_space<vmem>>, vector<1x128xf32>
    %c7 = arith.constant 7 : index
    %c0_5 = arith.constant 0 : index
    %5 = vector.load %arg1[%c7, %c0_5] : memref<24x128xf32, #tpu.memory_space<vmem>>, vector<1x128xf32>
    %c8 = arith.constant 8 : index
    %c0_6 = arith.constant 0 : index
    %6 = vector.load %arg1[%c8, %c0_6] : memref<24x128xf32, #tpu.memory_space<vmem>>, vector<1x128xf32>
    %c9 = arith.constant 9 : index
    %c0_7 = arith.constant 0 : index
    %7 = vector.load %arg1[%c9, %c0_7] : memref<24x128xf32, #tpu.memory_space<vmem>>, vector<1x128xf32>
    %c10 = arith.constant 10 : index
    %c0_8 = arith.constant 0 : index
    %8 = vector.load %arg1[%c10, %c0_8] : memref<24x128xf32, #tpu.memory_space<vmem>>, vector<1x128xf32>
    %c11 = arith.constant 11 : index
    %c0_9 = arith.constant 0 : index
    %9 = vector.load %arg1[%c11, %c0_9] : memref<24x128xf32, #tpu.memory_space<vmem>>, vector<1x128xf32>
    %c12 = arith.constant 12 : index
    %c0_10 = arith.constant 0 : index
    %10 = vector.load %arg1[%c12, %c0_10] : memref<24x128xf32, #tpu.memory_space<vmem>>, vector<1x128xf32>
    %c13 = arith.constant 13 : index
    %c0_11 = arith.constant 0 : index
    %11 = vector.load %arg1[%c13, %c0_11] : memref<24x128xf32, #tpu.memory_space<vmem>>, vector<1x128xf32>
    %c14 = arith.constant 14 : index
    %c0_12 = arith.constant 0 : index
    %12 = vector.load %arg1[%c14, %c0_12] : memref<24x128xf32, #tpu.memory_space<vmem>>, vector<1x128xf32>
    %c15 = arith.constant 15 : index
    %c0_13 = arith.constant 0 : index
    %13 = vector.load %arg1[%c15, %c0_13] : memref<24x128xf32, #tpu.memory_space<vmem>>, vector<1x128xf32>
    %c16 = arith.constant 16 : index
    %c0_14 = arith.constant 0 : index
    %14 = vector.load %arg1[%c16, %c0_14] : memref<24x128xf32, #tpu.memory_space<vmem>>, vector<1x128xf32>
    %15 = arith.mulf %7, %3 : vector<1x128xf32>
    %16 = arith.mulf %8, %4 : vector<1x128xf32>
    %cst = arith.constant 1.000000e-01 : f32
    %17 = vector.broadcast %cst : f32 to vector<1x128xf32>
    %18 = arith.mulf %16, %17 : vector<1x128xf32>
    %19 = arith.addf %2, %18 : vector<1x128xf32>
    %cst_15 = arith.constant 6.28318548 : f32
    %20 = vector.broadcast %cst_15 : f32 to vector<1x128xf32>
    %21 = arith.divf %19, %20 : vector<1x128xf32>
    %22 = math.floor %21 : vector<1x128xf32>
    %cst_16 = arith.constant 6.28318548 : f32
    %23 = vector.broadcast %cst_16 : f32 to vector<1x128xf32>
    %24 = arith.mulf %23, %22 : vector<1x128xf32>
    %25 = arith.subf %19, %24 : vector<1x128xf32>
    %cst_17 = arith.constant 3.14159274 : f32
    %26 = vector.broadcast %cst_17 : f32 to vector<1x128xf32>
    %27 = arith.cmpf ogt, %25, %26 : vector<1x128xf32>
    %cst_18 = arith.constant 6.28318548 : f32
    %28 = vector.broadcast %cst_18 : f32 to vector<1x128xf32>
    %29 = arith.subf %25, %28 : vector<1x128xf32>
    %30 = arith.select %27, %29, %25 : vector<1x128xi1>, vector<1x128xf32>
    %31 = math.cos %30 : vector<1x128xf32>
    %32 = math.sin %30 : vector<1x128xf32>
    %33 = arith.mulf %15, %31 : vector<1x128xf32>
    %cst_19 = arith.constant 1.000000e-01 : f32
    %34 = vector.broadcast %cst_19 : f32 to vector<1x128xf32>
    %35 = arith.mulf %33, %34 : vector<1x128xf32>
    %36 = arith.addf %0, %35 : vector<1x128xf32>
    %cst_20 = arith.constant -1.000000e+00 : f32
    %cst_21 = arith.constant 1.000000e+00 : f32
    %37 = vector.broadcast %cst_20 : f32 to vector<1x128xf32>
    %38 = arith.maximumf %37, %36 : vector<1x128xf32>
    %39 = vector.broadcast %cst_21 : f32 to vector<1x128xf32>
    %40 = arith.minimumf %39, %38 : vector<1x128xf32>
    %41 = arith.mulf %15, %32 : vector<1x128xf32>
    %cst_22 = arith.constant 1.000000e-01 : f32
    %42 = vector.broadcast %cst_22 : f32 to vector<1x128xf32>
    %43 = arith.mulf %41, %42 : vector<1x128xf32>
    %44 = arith.addf %1, %43 : vector<1x128xf32>
    %cst_23 = arith.constant -1.000000e+00 : f32
    %cst_24 = arith.constant 1.000000e+00 : f32
    %45 = vector.broadcast %cst_23 : f32 to vector<1x128xf32>
    %46 = arith.maximumf %45, %44 : vector<1x128xf32>
    %47 = vector.broadcast %cst_24 : f32 to vector<1x128xf32>
    %48 = arith.minimumf %47, %46 : vector<1x128xf32>
    %cst_25 = arith.constant 0.000000e+00 : f32
    %49 = vector.broadcast %cst_25 : f32 to vector<1x128xf32>
    %50 = arith.subf %49, %15 : vector<1x128xf32>
    %51 = arith.mulf %50, %32 : vector<1x128xf32>
    %cst_26 = arith.constant 1.000000e-01 : f32
    %52 = vector.broadcast %cst_26 : f32 to vector<1x128xf32>
    %53 = arith.mulf %51, %52 : vector<1x128xf32>
    %54 = arith.mulf %15, %31 : vector<1x128xf32>
    %cst_27 = arith.constant 1.000000e-01 : f32
    %55 = vector.broadcast %cst_27 : f32 to vector<1x128xf32>
    %56 = arith.mulf %54, %55 : vector<1x128xf32>
    %57 = math.exp %9 : vector<1x128xf32>
    %58 = math.exp %10 : vector<1x128xf32>
    %c0_28 = arith.constant 0 : index
    %c0_29 = arith.constant 0 : index
    %59 = vector.load %arg2[%c0_28, %c0_29] : memref<32x128xf32, #tpu.memory_space<vmem>>, vector<1x128xf32>
    %c1_30 = arith.constant 1 : index
    %c0_31 = arith.constant 0 : index
    %60 = vector.load %arg2[%c1_30, %c0_31] : memref<32x128xf32, #tpu.memory_space<vmem>>, vector<1x128xf32>
    %c2_32 = arith.constant 2 : index
    %c0_33 = arith.constant 0 : index
    %61 = vector.load %arg2[%c2_32, %c0_33] : memref<32x128xf32, #tpu.memory_space<vmem>>, vector<1x128xf32>
    %c5_34 = arith.constant 5 : index
    %c0_35 = arith.constant 0 : index
    %62 = vector.load %arg2[%c5_34, %c0_35] : memref<32x128xf32, #tpu.memory_space<vmem>>, vector<1x128xf32>
    %c6_36 = arith.constant 6 : index
    %c0_37 = arith.constant 0 : index
    %63 = vector.load %arg2[%c6_36, %c0_37] : memref<32x128xf32, #tpu.memory_space<vmem>>, vector<1x128xf32>
    %c7_38 = arith.constant 7 : index
    %c0_39 = arith.constant 0 : index
    %64 = vector.load %arg2[%c7_38, %c0_39] : memref<32x128xf32, #tpu.memory_space<vmem>>, vector<1x128xf32>
    %c10_40 = arith.constant 10 : index
    %c0_41 = arith.constant 0 : index
    %65 = vector.load %arg2[%c10_40, %c0_41] : memref<32x128xf32, #tpu.memory_space<vmem>>, vector<1x128xf32>
    %c11_42 = arith.constant 11 : index
    %c0_43 = arith.constant 0 : index
    %66 = vector.load %arg2[%c11_42, %c0_43] : memref<32x128xf32, #tpu.memory_space<vmem>>, vector<1x128xf32>
    %c12_44 = arith.constant 12 : index
    %c0_45 = arith.constant 0 : index
    %67 = vector.load %arg2[%c12_44, %c0_45] : memref<32x128xf32, #tpu.memory_space<vmem>>, vector<1x128xf32>
    %68 = arith.mulf %53, %65 : vector<1x128xf32>
    %69 = arith.addf %59, %68 : vector<1x128xf32>
    %70 = arith.mulf %53, %66 : vector<1x128xf32>
    %71 = arith.addf %60, %70 : vector<1x128xf32>
    %72 = arith.mulf %53, %67 : vector<1x128xf32>
    %73 = arith.addf %61, %72 : vector<1x128xf32>
    %74 = arith.mulf %56, %65 : vector<1x128xf32>
    %75 = arith.addf %62, %74 : vector<1x128xf32>
    %76 = arith.mulf %56, %66 : vector<1x128xf32>
    %77 = arith.addf %63, %76 : vector<1x128xf32>
    %78 = arith.mulf %56, %67 : vector<1x128xf32>
    %79 = arith.addf %64, %78 : vector<1x128xf32>
    %80 = arith.mulf %53, %73 : vector<1x128xf32>
    %81 = arith.addf %69, %80 : vector<1x128xf32>
    %82 = arith.mulf %56, %73 : vector<1x128xf32>
    %83 = arith.addf %71, %82 : vector<1x128xf32>
    %84 = arith.mulf %53, %79 : vector<1x128xf32>
    %85 = arith.addf %75, %84 : vector<1x128xf32>
    %86 = arith.mulf %56, %79 : vector<1x128xf32>
    %87 = arith.addf %77, %86 : vector<1x128xf32>
    %88 = arith.mulf %53, %67 : vector<1x128xf32>
    %89 = arith.addf %65, %88 : vector<1x128xf32>
    %90 = arith.mulf %56, %67 : vector<1x128xf32>
    %91 = arith.addf %66, %90 : vector<1x128xf32>
    %92 = arith.mulf %11, %15 : vector<1x128xf32>
    %93 = arith.subf %5, %92 : vector<1x128xf32>
    %94 = arith.mulf %12, %16 : vector<1x128xf32>
    %95 = arith.subf %6, %94 : vector<1x128xf32>
    %96 = math.exp %13 : vector<1x128xf32>
    %97 = math.exp %14 : vector<1x128xf32>
    %98 = arith.mulf %11, %11 : vector<1x128xf32>
    %99 = arith.mulf %98, %57 : vector<1x128xf32>
    %100 = arith.addf %99, %96 : vector<1x128xf32>
    %101 = arith.mulf %12, %12 : vector<1x128xf32>
    %102 = arith.mulf %101, %58 : vector<1x128xf32>
    %103 = arith.addf %102, %97 : vector<1x128xf32>
    %104 = arith.mulf %100, %103 : vector<1x128xf32>
    %cst_46 = arith.constant 1.000000e+00 : f32
    %105 = vector.broadcast %cst_46 : f32 to vector<1x128xf32>
    %106 = arith.divf %105, %104 : vector<1x128xf32>
    %107 = arith.mulf %103, %106 : vector<1x128xf32>
    %108 = arith.mulf %100, %106 : vector<1x128xf32>
    %109 = arith.mulf %11, %57 : vector<1x128xf32>
    %110 = arith.mulf %109, %107 : vector<1x128xf32>
    %111 = arith.mulf %12, %58 : vector<1x128xf32>
    %112 = arith.mulf %111, %108 : vector<1x128xf32>
    %113 = arith.mulf %110, %93 : vector<1x128xf32>
    %114 = arith.addf %15, %113 : vector<1x128xf32>
    %115 = arith.mulf %112, %95 : vector<1x128xf32>
    %116 = arith.addf %16, %115 : vector<1x128xf32>
    %117 = arith.mulf %110, %11 : vector<1x128xf32>
    %cst_47 = arith.constant 1.000000e+00 : f32
    %118 = vector.broadcast %cst_47 : f32 to vector<1x128xf32>
    %119 = arith.subf %118, %117 : vector<1x128xf32>
    %120 = arith.mulf %119, %57 : vector<1x128xf32>
    %121 = arith.mulf %112, %12 : vector<1x128xf32>
    %cst_48 = arith.constant 1.000000e+00 : f32
    %122 = vector.broadcast %cst_48 : f32 to vector<1x128xf32>
    %123 = arith.subf %122, %121 : vector<1x128xf32>
    %124 = arith.mulf %123, %58 : vector<1x128xf32>
    %125 = arith.mulf %3, %3 : vector<1x128xf32>
    %126 = arith.mulf %4, %4 : vector<1x128xf32>
    %127 = arith.addf %125, %126 : vector<1x128xf32>
    %128 = math.sqrt %127 : vector<1x128xf32>
    %cst_49 = arith.constant 1.000000e-01 : f32
    %129 = vector.broadcast %cst_49 : f32 to vector<1x128xf32>
    %130 = arith.cmpf ole, %128, %129 : vector<1x128xf32>
    %131 = arith.extui %130 : vector<1x128xi1> to vector<1x128xi32>
    %132 = arith.sitofp %131 : vector<1x128xi32> to vector<1x128xf32>
    %cst_50 = arith.constant 0.000000e+00 : f32
    %133 = vector.broadcast %cst_50 : f32 to vector<8x128xf32>
    %c0_51 = arith.constant 0 : index
    %c0_52 = arith.constant 0 : index
    %134 = vector.load %arg3[%c0_51, %c0_52] : memref<8x128xf32, #tpu.memory_space<vmem>>, vector<8x128xf32>
    tpu.vector_store %arg3[%c0_51, %c0_52], %133 {strides = array<i32>} : memref<8x128xf32, #tpu.memory_space<vmem>>, vector<8x128xf32>,
    %c0_53 = arith.constant 0 : index
    %c0_54 = arith.constant 0 : index
    %135 = vector.load %arg3[%c0_53, %c0_54] : memref<8x128xf32, #tpu.memory_space<vmem>>, vector<1x128xf32>
    tpu.vector_store %arg3[%c0_53, %c0_54], %40 {strides = array<i32>} : memref<8x128xf32, #tpu.memory_space<vmem>>, vector<1x128xf32>,
    %c1_55 = arith.constant 1 : index
    %c0_56 = arith.constant 0 : index
    %136 = vector.load %arg3[%c1_55, %c0_56] : memref<8x128xf32, #tpu.memory_space<vmem>>, vector<1x128xf32>
    tpu.vector_store %arg3[%c1_55, %c0_56], %48 {strides = array<i32>} : memref<8x128xf32, #tpu.memory_space<vmem>>, vector<1x128xf32>,
    %c2_57 = arith.constant 2 : index
    %c0_58 = arith.constant 0 : index
    %137 = vector.load %arg3[%c2_57, %c0_58] : memref<8x128xf32, #tpu.memory_space<vmem>>, vector<1x128xf32>
    tpu.vector_store %arg3[%c2_57, %c0_58], %30 {strides = array<i32>} : memref<8x128xf32, #tpu.memory_space<vmem>>, vector<1x128xf32>,
    %c3 = arith.constant 3 : index
    %c0_59 = arith.constant 0 : index
    %138 = vector.load %arg3[%c3, %c0_59] : memref<8x128xf32, #tpu.memory_space<vmem>>, vector<1x128xf32>
    tpu.vector_store %arg3[%c3, %c0_59], %114 {strides = array<i32>} : memref<8x128xf32, #tpu.memory_space<vmem>>, vector<1x128xf32>,
    %c4 = arith.constant 4 : index
    %c0_60 = arith.constant 0 : index
    %139 = vector.load %arg3[%c4, %c0_60] : memref<8x128xf32, #tpu.memory_space<vmem>>, vector<1x128xf32>
    tpu.vector_store %arg3[%c4, %c0_60], %116 {strides = array<i32>} : memref<8x128xf32, #tpu.memory_space<vmem>>, vector<1x128xf32>,
    %c5_61 = arith.constant 5 : index
    %c0_62 = arith.constant 0 : index
    %140 = vector.load %arg3[%c5_61, %c0_62] : memref<8x128xf32, #tpu.memory_space<vmem>>, vector<1x128xf32>
    tpu.vector_store %arg3[%c5_61, %c0_62], %132 {strides = array<i32>} : memref<8x128xf32, #tpu.memory_space<vmem>>, vector<1x128xf32>,
    %cst_63 = arith.constant 0.000000e+00 : f32
    %141 = vector.broadcast %cst_63 : f32 to vector<32x128xf32>
    %c0_64 = arith.constant 0 : index
    %c0_65 = arith.constant 0 : index
    %142 = vector.load %arg4[%c0_64, %c0_65] : memref<32x128xf32, #tpu.memory_space<vmem>>, vector<32x128xf32>
    tpu.vector_store %arg4[%c0_64, %c0_65], %141 {strides = array<i32>} : memref<32x128xf32, #tpu.memory_space<vmem>>, vector<32x128xf32>,
    %c0_66 = arith.constant 0 : index
    %c0_67 = arith.constant 0 : index
    %143 = vector.load %arg4[%c0_66, %c0_67] : memref<32x128xf32, #tpu.memory_space<vmem>>, vector<1x128xf32>
    tpu.vector_store %arg4[%c0_66, %c0_67], %81 {strides = array<i32>} : memref<32x128xf32, #tpu.memory_space<vmem>>, vector<1x128xf32>,
    %c1_68 = arith.constant 1 : index
    %c0_69 = arith.constant 0 : index
    %144 = vector.load %arg4[%c1_68, %c0_69] : memref<32x128xf32, #tpu.memory_space<vmem>>, vector<1x128xf32>
    tpu.vector_store %arg4[%c1_68, %c0_69], %83 {strides = array<i32>} : memref<32x128xf32, #tpu.memory_space<vmem>>, vector<1x128xf32>,
    %c2_70 = arith.constant 2 : index
    %c0_71 = arith.constant 0 : index
    %145 = vector.load %arg4[%c2_70, %c0_71] : memref<32x128xf32, #tpu.memory_space<vmem>>, vector<1x128xf32>
    tpu.vector_store %arg4[%c2_70, %c0_71], %73 {strides = array<i32>} : memref<32x128xf32, #tpu.memory_space<vmem>>, vector<1x128xf32>,
    %c5_72 = arith.constant 5 : index
    %c0_73 = arith.constant 0 : index
    %146 = vector.load %arg4[%c5_72, %c0_73] : memref<32x128xf32, #tpu.memory_space<vmem>>, vector<1x128xf32>
    tpu.vector_store %arg4[%c5_72, %c0_73], %85 {strides = array<i32>} : memref<32x128xf32, #tpu.memory_space<vmem>>, vector<1x128xf32>,
    %c6_74 = arith.constant 6 : index
    %c0_75 = arith.constant 0 : index
    %147 = vector.load %arg4[%c6_74, %c0_75] : memref<32x128xf32, #tpu.memory_space<vmem>>, vector<1x128xf32>
    tpu.vector_store %arg4[%c6_74, %c0_75], %87 {strides = array<i32>} : memref<32x128xf32, #tpu.memory_space<vmem>>, vector<1x128xf32>,
    %c7_76 = arith.constant 7 : index
    %c0_77 = arith.constant 0 : index
    %148 = vector.load %arg4[%c7_76, %c0_77] : memref<32x128xf32, #tpu.memory_space<vmem>>, vector<1x128xf32>
    tpu.vector_store %arg4[%c7_76, %c0_77], %79 {strides = array<i32>} : memref<32x128xf32, #tpu.memory_space<vmem>>, vector<1x128xf32>,
    %c10_78 = arith.constant 10 : index
    %c0_79 = arith.constant 0 : index
    %149 = vector.load %arg4[%c10_78, %c0_79] : memref<32x128xf32, #tpu.memory_space<vmem>>, vector<1x128xf32>
    tpu.vector_store %arg4[%c10_78, %c0_79], %89 {strides = array<i32>} : memref<32x128xf32, #tpu.memory_space<vmem>>, vector<1x128xf32>,
    %c11_80 = arith.constant 11 : index
    %c0_81 = arith.constant 0 : index
    %150 = vector.load %arg4[%c11_80, %c0_81] : memref<32x128xf32, #tpu.memory_space<vmem>>, vector<1x128xf32>
    tpu.vector_store %arg4[%c11_80, %c0_81], %91 {strides = array<i32>} : memref<32x128xf32, #tpu.memory_space<vmem>>, vector<1x128xf32>,
    %c12_82 = arith.constant 12 : index
    %c0_83 = arith.constant 0 : index
    %151 = vector.load %arg4[%c12_82, %c0_83] : memref<32x128xf32, #tpu.memory_space<vmem>>, vector<1x128xf32>
    tpu.vector_store %arg4[%c12_82, %c0_83], %67 {strides = array<i32>} : memref<32x128xf32, #tpu.memory_space<vmem>>, vector<1x128xf32>,
    %c18 = arith.constant 18 : index
    %c0_84 = arith.constant 0 : index
    %152 = vector.load %arg4[%c18, %c0_84] : memref<32x128xf32, #tpu.memory_space<vmem>>, vector<1x128xf32>
    tpu.vector_store %arg4[%c18, %c0_84], %120 {strides = array<i32>} : memref<32x128xf32, #tpu.memory_space<vmem>>, vector<1x128xf32>,
    %c24 = arith.constant 24 : index
    %c0_85 = arith.constant 0 : index
    %153 = vector.load %arg4[%c24, %c0_85] : memref<32x128xf32, #tpu.memory_space<vmem>>, vector<1x128xf32>
    tpu.vector_store %arg4[%c24, %c0_85], %124 {strides = array<i32>} : memref<32x128xf32, #tpu.memory_space<vmem>>, vector<1x128xf32>,
    return
  }
  func.func @transform_0(%arg0: i32) -> (i32, i32) {
    %c0_i32 = arith.constant 0 : i32
    %c0_i32_0 = arith.constant 0 : i32
    return %c0_i32, %arg0 : i32, i32
  }
  func.func @transform_1(%arg0: i32) -> (i32, i32) {
    %c0_i32 = arith.constant 0 : i32
    %c0_i32_0 = arith.constant 0 : i32
    return %c0_i32, %arg0 : i32, i32
  }
  func.func @transform_2(%arg0: i32) -> (i32, i32) {
    %c0_i32 = arith.constant 0 : i32
    %c0_i32_0 = arith.constant 0 : i32
    return %c0_i32, %arg0 : i32, i32
  }
  func.func @transform_3(%arg0: i32) -> (i32, i32) {
    %c0_i32 = arith.constant 0 : i32
    %c0_i32_0 = arith.constant 0 : i32
    return %c0_i32, %arg0 : i32, i32
  }
}

</mosaic_0001>

<llo_original>
// kernel: belief_step_batch.1
$region0: #{belief_step_batch.1}
  #allocation0 [shape = 'u32[]', space=smem, size = 0x4, offset = 0x4, fixed_abs, tag = 'smem constant byte address 0x4 - core index']
  #allocation1 [shape = 'u32[144,128]{1,0:T(1,128)}', space=vmem, size = 0x12000, scoped, tag = 'internal scratch']
  %s0 = inlined_call_operand.vmem [shape: f32[24,128], index: 0, kind: input, shape index: {}]
  %s1 = inlined_call_operand.vmem [shape: f32[32,128], index: 1, kind: input, shape index: {}, may-alias: {1,3}]
  %s2 = inlined_call_operand.vmem [shape: f32[8,128], index: 2, kind: output, shape index: {0}]
  %s3 = inlined_call_operand.vmem [shape: f32[32,128], index: 3, kind: output, shape index: {1}, may-alias: {1,3}]
  %4 = xla_tuple %s2, %s3
  %s5 = sld [smem:[#allocation0]]
  $region26: #{belief_step_batch.1} parent=0
    _
  %s7 = ssub.s32 1, %s5
  %s8 = scalar_select 0, %s7, %s5
  // Predicated region
  $region2: #{belief_step_batch.1} parent=0 // pred_check
    _
  $region3: #{belief_step_batch.1} parent=0 // pred_check_branch
    %10 = sbr.rel (0) target = $region5
  $region4: #{belief_step_batch.1} parent=0 // pred_region
    _
  $region5: #{belief_step_batch.1} parent=0 // pred_fallthru
    _
  // Predicated region
  $region6: #{belief_step_batch.1} parent=0 // pred_check
    _
  $region7: #{belief_step_batch.1} parent=0 // pred_check_branch
    %12 = sbr.rel (0) target = $region9
  $region8: #{belief_step_batch.1} parent=0 // pred_region
    _
  $region9: #{belief_step_batch.1} parent=0 // pred_fallthru
    _
  %v13 = vld [vmem:[%s0] sm:$0x1]
  %v14 = vld [vmem:[%s0 + $0x1] sm:$0x1]
  %v15 = vld [vmem:[%s0 + $0x2] sm:$0x1]
  %v16 = vld [vmem:[%s0 + $0x5] sm:$0x1]
  %v17 = vld [vmem:[%s0 + $0x6] sm:$0x1]
  %v18 = vld [vmem:[%s0 + $0x7] sm:$0x1]
  %v19 = vld [vmem:[%s0 + $0x8] sm:$0x1]
  %v20 = vld [vmem:[%s0 + $0x9] sm:$0x1]
  %v21 = vld [vmem:[%s0 + $0xa] sm:$0x1]
  %v22 = vld [vmem:[%s0 + $0xb] sm:$0x1]
  %v23 = vld [vmem:[%s0 + $0xc] sm:$0x1]
  %v24 = vld [vmem:[%s0 + $0xd] sm:$0x1]
  %v25 = vld [vmem:[%s0 + $0xe] sm:$0x1]
  %v26 = vld [vmem:[%s0 + $0xf] sm:$0x1]
  %v27 = vld [vmem:[%s0 + $0x10] sm:$0x1]
  %v28 = vmul.f32 %v20, %v16
  %v29 = vmul.f32 %v21, %v17
  %v30 = vmul.f32 %v29, 0.1
  %v31 = vadd.f32 %v15, %v30
  %v32 = vrcp.pop 6.2831855
  %v33 = vmul.f32 %v31, %v32
  %v34 = vfloor.f32 %v33
  %v35 = vmul.f32 %v34, 6.2831855
  %v36 = vsub.f32 %v31, %v35
  %vm37 = vcmp.gt.f32.partialorder %v36, 3.1415927
  %v38 = vsub.f32 %v36, 6.2831855
  %v39 = vsel %vm37, %v38, %v36
  %v40 = vand.u32 2147483647, %v39
  %vm41 = vcmp.le.f32.partialorder %v40, 0.7853982
  %vm42 = vcmp.lt.s32.totalorder %v39, 0
  %v43 = vand.u32 %v39, 2139095040
  %v44 = vshrl.u32 %v43, 23
  %v45 = vsub.s32 %v44, 127
  %v46 = vand.u32 2147483647, %v39
  %v47 = vand.u32 %v46, 8388607
  %v48 = vor.u32 %v47, 8388608
  %v49 = vsub.s32 0, %v48
  %v50 = vadd.s32 %v45, 1
  %vm51 = vcmp.gt.s32.totalorder %v50, 0
  %v52 = vsel %vm51, %v50, 0
  %v53 = vshrl.u32 %v52, 5
  %v54 = vand.u32 %v52, 31
  %v55 = vsub.s32 32, %v54
  %v56 = vshrl.u32 683565275, %v55
  %v57 = vshll.u32 683565275, %v54
  %v58 = vshrl.u32 2475754826, %v55
  %v59 = vor.u32 %v57, %v58
  %v60 = vshll.u32 2475754826, %v54
  %v61 = vshrl.u32 2131351028, %v55
  %v62 = vor.u32 %v60, %v61
  %v63 = vshll.u32 2131351028, %v54
  %v64 = vshrl.u32 2102212464, %v55
  %v65 = vor.u32 %v63, %v64
  %v66 = vshll.u32 2102212464, %v54
  %v67 = vshrl.u32 920167782, %v55
  %v68 = vor.u32 %v66, %v67
  %v69 = vshll.u32 920167782, %v54
  %v70 = vshrl.u32 1326507024, %v55
  %v71 = vor.u32 %v69, %v70
  %vm72 = vcmp.lt.s32.totalorder %v53, 1
  %vm73 = vcmp.lt.s32.totalorder %v53, 2
  %vm74 = vcmp.lt.s32.totalorder %v53, 3
  %vm75 = vcmp.lt.s32.totalorder %v53, 4
  %v76 = vsel %vm72, %v56, %v59
  %v77 = vsel %vm75, %v65, 2102212464
  %v78 = vsel %vm74, %v62, %v77
  %v79 = vsel %vm73, %v76, %v78
  %v80 = vsel %vm72, %v59, %v62
  %v81 = vsel %vm75, %v68, 920167782
  %v82 = vsel %vm74, %v65, %v81
  %v83 = vsel %vm73, %v80, %v82
  %v84 = vsel %vm72, %v62, %v65
  %v85 = vsel %vm75, %v71, 1326507024
  %v86 = vsel %vm74, %v68, %v85
  %v87 = vsel %vm73, %v84, %v86
  %v88 = vshll.u32 %v48, 8
  %v89 = vmul.u32.u64.compose %v88, %v87
  %v90 = vextract.low.u32 %v89
  %v91 = vextract.high.u32 %v89
  %v92 = vmul.u32.u64.compose %v88, %v83
  %v93 = vextract.low.u32 %v92
  %v94 = vextract.high.u32 %v92
  %v95 = vmul.u32 %v88, %v79
  %v96 = vadd.s32 %v91, %v93
  %vm97 = vc.u32 %v91, %v93
  %v98 = vadd.s32 %v94, 1
  %v99 = vsel %vm97, %v98, %v94
  %v100 = vadd.s32 %v95, %v99
  %v101 = vadd.s32 %v100, 536870912
  %v102 = vshrl.u32 %v101, 30
  %v103 = vshll.u32 %v102, 30
  %v104 = vsub.s32 %v100, %v103
  %vm105 = vcmp.lt.s32.totalorder %v104, 0
  %v106 = vsub.s32 0, %v104
  %v107 = vsel %vm105, %v106, %v104
  %v108 = vclz %v107
  %v109 = vsub.s32 %v108, 2
  %vm110 = vcmp.gt.s32.totalorder 0, %v109
  %v111 = vsel %vm110, 0, %v109
  %v112 = vsub.s32 32, %v111
  %v113 = vshll.u32 %v104, %v111
  %v114 = vshrl.u32 %v96, %v112
  %v115 = vor.u32 %v113, %v114
  %v116 = vsub.s32 4294967266, %v111
  %v117 = vadd.s32 %v116, 127
  %v118 = vshll.u32 %v117, 23
  %v119 = vor.u32 4788187, %v118
  %v120 = vand.u32 2147483647, %v119
  %v122 = vcvt.s32.f32 %v115
  %v123 = vmul.f32 %v122, %v120
  %v124 = vxor.u32 %v123, 2147483648
  %v125 = vsel %vm42, %v124, %v123
  %v126 = vsub.s32 4, %v102
  %v127 = vsel %vm42, %v126, %v102
  %v128 = vsel %vm41, %v39, %v125
  %v129 = vsel %vm41, 0, %v127
  %v130 = vcosq.f32.pop %v128
  %v131 = vsinq.f32.pop %v128
  %vm132 = vweird.f32 %v39
  %v133 = vand.u32 %v129, 3
  %vm134 = vcmp.lt.s32.totalorder %v133, 2
  %vm135 = vcmp.eq.s32.totalorder %v133, 0
  %v136 = vxor.u32 %v131, 2147483648
  %v137 = vsel %vm135, %v130, %v136
  %vm138 = vcmp.eq.s32.totalorder %v133, 2
  %v139 = vxor.u32 %v130, 2147483648
  %v140 = vsel %vm138, %v139, %v131
  %v141 = vsel %vm134, %v137, %v140
  %v142 = vsel %vm132, nan, %v141
  %v143 = vand.u32 2147483647, %v39
  %vm144 = vcmp.le.f32.partialorder %v143, 0.7853982
  %vm145 = vcmp.lt.s32.totalorder %v39, 0
  %v146 = vand.u32 %v39, 2139095040
  %v147 = vshrl.u32 %v146, 23
  %v148 = vsub.s32 %v147, 127
  %v149 = vand.u32 2147483647, %v39
  %v150 = vand.u32 %v149, 8388607
  %v151 = vor.u32 %v150, 8388608
  %v152 = vsub.s32 0, %v151
  %v153 = vadd.s32 %v148, 1
  %vm154 = vcmp.gt.s32.totalorder %v153, 0
  %v155 = vsel %vm154, %v153, 0
  %v156 = vshrl.u32 %v155, 5
  %v157 = vand.u32 %v155, 31
  %v158 = vsub.s32 32, %v157
  %v159 = vshrl.u32 683565275, %v158
  %v160 = vshll.u32 683565275, %v157
  %v161 = vshrl.u32 2475754826, %v158
  %v162 = vor.u32 %v160, %v161
  %v163 = vshll.u32 2475754826, %v157
  %v164 = vshrl.u32 2131351028, %v158
  %v165 = vor.u32 %v163, %v164
  %v166 = vshll.u32 2131351028, %v157
  %v167 = vshrl.u32 2102212464, %v158
  %v168 = vor.u32 %v166, %v167
  %v169 = vshll.u32 2102212464, %v157
  %v170 = vshrl.u32 920167782, %v158
  %v171 = vor.u32 %v169, %v170
  %v172 = vshll.u32 920167782, %v157
  %v173 = vshrl.u32 1326507024, %v158
  %v174 = vor.u32 %v172, %v173
  %vm175 = vcmp.lt.s32.totalorder %v156, 1
  %vm176 = vcmp.lt.s32.totalorder %v156, 2
  %vm177 = vcmp.lt.s32.totalorder %v156, 3
  %vm178 = vcmp.lt.s32.totalorder %v156, 4
  %v179 = vsel %vm175, %v159, %v162
  %v180 = vsel %vm178, %v168, 2102212464
  %v181 = vsel %vm177, %v165, %v180
  %v182 = vsel %vm176, %v179, %v181
  %v183 = vsel %vm175, %v162, %v165
  %v184 = vsel %vm178, %v171, 920167782
  %v185 = vsel %vm177, %v168, %v184
  %v186 = vsel %vm176, %v183, %v185
  %v187 = vsel %vm175, %v165, %v168
  %v188 = vsel %vm178, %v174, 1326507024
  %v189 = vsel %vm177, %v171, %v188
  %v190 = vsel %vm176, %v187, %v189
  %v191 = vshll.u32 %v151, 8
  %v192 = vmul.u32.u64.compose %v191, %v190
  %v193 = vextract.low.u32 %v192
  %v194 = vextract.high.u32 %v192
  %v195 = vmul.u32.u64.compose %v191, %v186
  %v196 = vextract.low.u32 %v195
  %v197 = vextract.high.u32 %v195
  %v198 = vmul.u32 %v191, %v182
  %v199 = vadd.s32 %v194, %v196
  %vm200 = vc.u32 %v194, %v196
  %v201 = vadd.s32 %v197, 1
  %v202 = vsel %vm200, %v201, %v197
  %v203 = vadd.s32 %v198, %v202
  %v204 = vadd.s32 %v203, 536870912
  %v205 = vshrl.u32 %v204, 30
  %v206 = vshll.u32 %v205, 30
  %v207 = vsub.s32 %v203, %v206
  %vm208 = vcmp.lt.s32.totalorder %v207, 0
  %v209 = vsub.s32 0, %v207
  %v210 = vsel %vm208, %v209, %v207
  %v211 = vclz %v210
  %v212 = vsub.s32 %v211, 2
  %vm213 = vcmp.gt.s32.totalorder 0, %v212
  %v214 = vsel %vm213, 0, %v212
  %v215 = vsub.s32 32, %v214
  %v216 = vshll.u32 %v207, %v214
  %v217 = vshrl.u32 %v199, %v215
  %v218 = vor.u32 %v216, %v217
  %v219 = vsub.s32 4294967266, %v214
  %v220 = vadd.s32 %v219, 127
  %v221 = vshll.u32 %v220, 23
  %v222 = vor.u32 4788187, %v221
  %v223 = vand.u32 2147483647, %v222
  %v225 = vcvt.s32.f32 %v218
  %v226 = vmul.f32 %v225, %v223
  %v227 = vxor.u32 %v226, 2147483648
  %v228 = vsel %vm145, %v227, %v226
  %v229 = vsub.s32 4, %v205
  %v230 = vsel %vm145, %v229, %v205
  %v231 = vsel %vm144, %v39, %v228
  %v232 = vsel %vm144, 0, %v230
  %v233 = vcosq.f32.pop %v231
  %v234 = vsinq.f32.pop %v231
  %vm235 = vweird.f32 %v39
  %v236 = vadd.s32 %v232, 3
  %v237 = vand.u32 %v236, 3
  %vm238 = vcmp.lt.s32.totalorder %v237, 2
  %vm239 = vcmp.eq.s32.totalorder %v237, 0
  %v240 = vxor.u32 %v234, 2147483648
  %v241 = vsel %vm239, %v233, %v240
  %vm242 = vcmp.eq.s32.totalorder %v237, 2
  %v243 = vxor.u32 %v233, 2147483648
  %v244 = vsel %vm242, %v243, %v234
  %v245 = vsel %vm238, %v241, %v244
  %v246 = vsel %vm235, nan, %v245
  %v247 = vmul.f32 %v28, %v142
  %v248 = vmul.f32 %v247, 0.1
  %v249 = vadd.f32 %v13, %v248
  %v250 = vmax.f32 %v249, -1.0
  %v251 = vmin.f32 %v250, 1.0
  %v252 = vmul.f32 %v28, %v246
  %v253 = vmul.f32 %v252, 0.1
  %v254 = vadd.f32 %v14, %v253
  %v255 = vmax.f32 %v254, -1.0
  %v256 = vmin.f32 %v255, 1.0
  %v257 = vsub.f32 0.0, %v28
  %v258 = vmul.f32 %v257, %v246
  %v259 = vmul.f32 %v258, 0.1
  %v260 = vmul.f32 %v22, 1.442695
  %v261 = vpow.pop %v260
  %v262 = vmul.f32 %v23, 1.442695
  %v263 = vpow.pop %v262
  %v264 = vld [vmem:[%s1] sm:$0x1]
  %v265 = vld [vmem:[%s1 + $0x1] sm:$0x1]
  %v266 = vld [vmem:[%s1 + $0x2] sm:$0x1]
  %v267 = vld [vmem:[%s1 + $0x5] sm:$0x1]
  %v268 = vld [vmem:[%s1 + $0x6] sm:$0x1]
  %v269 = vld [vmem:[%s1 + $0x7] sm:$0x1]
  %v270 = vld [vmem:[%s1 + $0xa] sm:$0x1]
  %v271 = vld [vmem:[%s1 + $0xb] sm:$0x1]
  %v272 = vld [vmem:[%s1 + $0xc] sm:$0x1]
  %v273 = vmul.f32 %v259, %v270
  %v274 = vadd.f32 %v264, %v273
  %v275 = vmul.f32 %v259, %v271
  %v276 = vadd.f32 %v265, %v275
  %v277 = vmul.f32 %v259, %v272
  %v278 = vadd.f32 %v266, %v277
  %v279 = vmul.f32 %v248, %v270
  %v280 = vadd.f32 %v267, %v279
  %v281 = vmul.f32 %v248, %v271
  %v282 = vadd.f32 %v268, %v281
  %v283 = vmul.f32 %v248, %v272
  %v284 = vadd.f32 %v269, %v283
  %v285 = vmul.f32 %v259, %v278
  %v286 = vadd.f32 %v274, %v285
  %v287 = vmul.f32 %v248, %v278
  %v288 = vadd.f32 %v276, %v287
  %v289 = vmul.f32 %v259, %v284
  %v290 = vadd.f32 %v280, %v289
  %v291 = vmul.f32 %v248, %v284
  %v292 = vadd.f32 %v282, %v291
  %v293 = vadd.f32 %v270, %v277
  %v294 = vadd.f32 %v271, %v283
  %v295 = vmul.f32 %v24, %v28
  %v296 = vsub.f32 %v18, %v295
  %v297 = vmul.f32 %v25, %v29
  %v298 = vsub.f32 %v19, %v297
  %v299 = vmul.f32 %v26, 1.442695
  %v300 = vpow.pop %v299
  %v301 = vmul.f32 %v27, 1.442695
  %v302 = vpow.pop %v301
  %v303 = vmul.f32 %v24, %v24
  %v304 = vmul.f32 %v303, %v261
  %v305 = vadd.f32 %v304, %v300
  %v306 = vmul.f32 %v25, %v25
  %v307 = vmul.f32 %v306, %v263
  %v308 = vadd.f32 %v307, %v302
  %v309 = vmul.f32 %v305, %v308
  %v310 = vrcp.pop %v309
  %v311 = vmul.f32 1.0, %v310
  %v312 = vmul.f32 %v308, %v311
  %v313 = vmul.f32 %v305, %v311
  %v314 = vmul.f32 %v24, %v261
  %v315 = vmul.f32 %v314, %v312
  %v316 = vmul.f32 %v25, %v263
  %v317 = vmul.f32 %v316, %v313
  %v318 = vmul.f32 %v315, %v296
  %v319 = vadd.f32 %v28, %v318
  %v320 = vmul.f32 %v317, %v298
  %v321 = vadd.f32 %v29, %v320
  %v322 = vmul.f32 %v315, %v24
  %v323 = vsub.f32 1.0, %v322
  %v324 = vmul.f32 %v323, %v261
  %v325 = vmul.f32 %v317, %v25
  %v326 = vsub.f32 1.0, %v325
  %v327 = vmul.f32 %v326, %v263
  %v328 = vmul.f32 %v16, %v16
  %v329 = vmul.f32 %v17, %v17
  %v330 = vadd.f32 %v328, %v329
  %v331 = vrsqrt.pop %v330
  %v332 = vmul.f32 %v330, %v331
  %vm333 = vcmp.eq.f32.partialorder %v330, inf
  %v334 = vsel %vm333, %v330, %v332
  %vm335 = vcmp.eq.f32.partialorder %v330, 0.0
  %v336 = vand.u32 %v330, 2147483648
  %v337 = vsel %vm335, %v336, %v334
  %vm338 = vcmp.le.f32.partialorder %v337, 0.1
  %v339 = vsel %vm338, 1, 0
  %v340 = vcvt.s32.f32 %v339
  %341 = vst [vmem:[%s2] sm:$0xff] 0.0
  %342 = vst [vmem:[%s2] sm:$0x1] %v251
  %343 = vst [vmem:[%s2 + $0x1] sm:$0x1] %v256
  %344 = vst [vmem:[%s2 + $0x2] sm:$0x1] %v39
  %345 = vst [vmem:[%s2 + $0x3] sm:$0x1] %v319
  %346 = vst [vmem:[%s2 + $0x4] sm:$0x1] %v321
  %347 = vst [vmem:[%s2 + $0x5] sm:$0x1] %v340
  %348 = vst [vmem:[%s3] sm:$0xff] 0.0
  %349 = vst [vmem:[%s3 + $0x8] sm:$0xff] 0.0
  %350 = vst [vmem:[%s3 + $0x10] sm:$0xff] 0.0
  %351 = vst [vmem:[%s3 + $0x18] sm:$0xff] 0.0
  %352 = vst [vmem:[%s3] sm:$0x1] %v286
  %353 = vst [vmem:[%s3 + $0x1] sm:$0x1] %v288
  %354 = vst [vmem:[%s3 + $0x2] sm:$0x1] %v278
  %355 = vst [vmem:[%s3 + $0x5] sm:$0x1] %v290
  %356 = vst [vmem:[%s3 + $0x6] sm:$0x1] %v292
  %357 = vst [vmem:[%s3 + $0x7] sm:$0x1] %v284
  %358 = vst [vmem:[%s3 + $0xa] sm:$0x1] %v293
  %359 = vst [vmem:[%s3 + $0xb] sm:$0x1] %v294
  %360 = vst [vmem:[%s3 + $0xc] sm:$0x1] %v272
  %361 = vst [vmem:[%s3 + $0x12] sm:$0x1] %v324
  %362 = vst [vmem:[%s3 + $0x18] sm:$0x1] %v327
  // Predicated region
  $region10: #{belief_step_batch.1} parent=0 // pred_check
    _
  $region11: #{belief_step_batch.1} parent=0 // pred_check_branch
    %364 = sbr.rel (0) target = $region13
  $region12: #{belief_step_batch.1} parent=0 // pred_region
    _
  $region13: #{belief_step_batch.1} parent=0 // pred_fallthru
    _
  // Predicated region
  $region14: #{belief_step_batch.1} parent=0 // pred_check
    _
  $region15: #{belief_step_batch.1} parent=0 // pred_check_branch
    %366 = sbr.rel (0) target = $region17
  $region16: #{belief_step_batch.1} parent=0 // pred_region
    _
  $region17: #{belief_step_batch.1} parent=0 // pred_fallthru
    _
  // Predicated region
  $region18: #{belief_step_batch.1} parent=0 // pred_check
    _
  $region19: #{belief_step_batch.1} parent=0 // pred_check_branch
    %368 = sbr.rel (0) target = $region21
  $region20: #{belief_step_batch.1} parent=0 // pred_region
    _
  $region21: #{belief_step_batch.1} parent=0 // pred_fallthru
    _
  // Predicated region
  $region22: #{belief_step_batch.1} parent=0 // pred_check
    _
  $region23: #{belief_step_batch.1} parent=0 // pred_check_branch
    %370 = sbr.rel (0) target = $region25
  $region24: #{belief_step_batch.1} parent=0 // pred_region
    _
  $region25: #{belief_step_batch.1} parent=0 // pred_fallthru
    _

</llo_original>
